<compile_context>
chip_gen: v5e
topology: v5e:2x2
jax: 0.10.0
libtpu: 0.0.40
codegen_flags: <defaults>
</compile_context>

<pallas_src>
import functools
import numpy as np

import jax
import jax.numpy as jnp
from jax import lax
from jax.experimental import pallas as pl
from jax.experimental.pallas import tpu as pltpu


# ----------------------------------------------------------------------------
# Static (trace-time) helper: interpolation matrix (glue, computed once).
# ----------------------------------------------------------------------------
def _interp_matrix(n_in, n_out):
    """W (n_out, n_in): PyTorch F.interpolate(..., mode='linear', align_corners=False)."""
    W = np.zeros((n_out, n_in), dtype=np.float32)
    scale = n_in / n_out
    for i in range(n_out):
        src = scale * (i + 0.5) - 0.5
        src = max(src, 0.0)
        i0 = min(int(np.floor(src)), n_in - 1)
        i1 = i0 + 1 if i0 < n_in - 1 else i0
        lam1 = src - i0
        W[i, i0] += 1.0 - lam1
        W[i, i1] += lam1
    return W


# ----------------------------------------------------------------------------
# Pallas kernel: one batch TILE per grid step (batch folded onto sublanes).
# ----------------------------------------------------------------------------
def _deep_conv1d_kernel(deep_ref, x_ref, wt_ref, wc_ref, bc_ref, wf_ref, o_ref,
                        *, k, s, p, n, tb, ci, L):
    cd = wc_ref.shape[1]
    co = wf_ref.shape[0]

    # 1) F.interpolate(deep, size=n, mode='linear') as ONE matmul over the whole
    #    batch tile: (TB*Cd, Nd) @ (Nd, N) -> (TB*Cd, N).
    xr = jnp.dot(deep_ref[...], wt_ref[...], preferred_element_type=jnp.float32)

    # 2) DeepShuffle1d 1x1 conv + bias: per-batch contraction over Cd
    #    (batched matmul, same pattern as flash-attention einsums).
    xr3 = xr.reshape(tb, cd, n)
    wc_b = jnp.broadcast_to(wc_ref[...][None], (tb, ci, cd))
    y3 = jnp.einsum('boc,bcn->bon', wc_b, xr3, preferred_element_type=jnp.float32)
    y3 = y3 + bc_ref[...][None]                         # (TB, Ci, N) + (1, Ci, 1)
    y = y3.reshape(tb * ci, n)

    # 3) var/mean normalisation per (batch, channel) row (torch unbiased var).
    mean = jnp.mean(y, axis=1, keepdims=True)
    diff = y - mean
    var = jnp.sum(diff * diff, axis=1, keepdims=True) * (1.0 / (n - 1))
    xs = diff * (0.5 / (var + 1e-9))                    # gama = 0.5, one divide per row

    # 4) unfold1d = reflect pad + shifted slices (no one-hot gather matmuls).
    def pad_reflect(a):
        if p == 0:
            return a
        left = [a[:, j:j + 1] for j in range(p, 0, -1)]            # a[:,p], ..., a[:,1]
        right = [a[:, n - 2 - j:n - 1 - j] for j in range(p)]      # a[:,n-2], ..., a[:,n-1-p]
        return jnp.concatenate(left + [a] + right, axis=1)

    def taps(a):
        if s == 1:
            return [a[:, ki:ki + L] for ki in range(k)]            # pure shifted views
        # TODO(synk): stride > 1 path relies on lax.slice with strides; not exercised here.
        return [lax.slice(a, (0, ki), (a.shape[0], ki + (L - 1) * s + 1), (1, s))
                for ki in range(k)]

    x1 = taps(pad_reflect(xs))
    y1 = taps(pad_reflect(x_ref[...]))

    # 5) deep loss normalised over taps; the center tap is just x1[k//2] (free slice).
    center = x1[k // 2]
    loss = [1.0 - jnp.tanh(jnp.abs(x1[ki] - center)) ** 2 for ki in range(k)]
    alpha = pl.reciprocal(sum(loss), approx=True)                  # EUP slot
    weighted = [loss[ki] * alpha * y1[ki] for ki in range(k)]      # each (TB*Ci, L)

    # 6) fc: single fused (Co, Ci*k) @ (Ci*k, L) contraction per batch element.
    if ci == 1:
        rhs = jnp.stack(weighted, axis=1)                          # (TB, k, L)
    else:
        rhs = jnp.stack([w.reshape(tb, ci, L) for w in weighted], axis=2)
        rhs = rhs.reshape(tb, ci * k, L)                           # ci-major, k-minor
    wf_b = jnp.broadcast_to(wf_ref[...][None], (tb, co, ci * k))
    out = jnp.einsum('bof,bfl->bol', wf_b, rhs, preferred_element_type=jnp.float32)
    o_ref[...] = out.astype(o_ref.dtype)                           # (TB, Co, L)


# ----------------------------------------------------------------------------
# Wrapper
# ----------------------------------------------------------------------------
def deep_conv1d(deep, x, conv_w, conv_b, fc_w, *, kernel_size, stride=1, padding=0):
    b, ci, n = x.shape
    _, cd, nd = deep.shape
    k, s, p = kernel_size, stride, padding
    co = fc_w.shape[0]
    L = (n + 2 * p - k) // s + 1

    # Batch tile: whole batch per grid step when small, otherwise a divisor of B
    # (keeps the grid "parallel" so v7x's two TensorCores both get work for big B).
    if b <= 8:
        tb = b
    else:
        tb = next(c for c in (8, 4, 2, 1) if b % c == 0)
    grid = (b // tb,)

    wt = jnp.asarray(_interp_matrix(nd, n).T)                      # (Nd, N)
    wc2 = conv_w.reshape(ci, cd).astype(jnp.float32)               # Conv1d(Cd, Ci, 1) weight
    bc2 = conv_b.reshape(ci, 1).astype(jnp.float32)
    wf2 = fc_w.reshape(co, ci * k).astype(jnp.float32)             # Linear weight (c-major, k-minor)

    deep2 = deep.reshape(b * cd, nd).astype(jnp.float32)           # batch folded onto sublanes
    x2 = x.reshape(b * ci, n).astype(jnp.float32)

    kernel = functools.partial(_deep_conv1d_kernel,
                               k=k, s=s, p=p, n=n, tb=tb, ci=ci, L=L)
    out = pl.pallas_call(
        kernel,
        out_shape=jax.ShapeDtypeStruct((b, co, L), jnp.float32),
        grid=grid,
        in_specs=[
            pl.BlockSpec((tb * cd, nd), lambda i: (i, 0)),         # deep (batch tile)
            pl.BlockSpec((tb * ci, n), lambda i: (i, 0)),          # x    (batch tile)
            pl.BlockSpec((nd, n), lambda i: (0, 0)),               # interp matrix (constant)
            pl.BlockSpec((ci, cd), lambda i: (0, 0)),              # conv weight   (constant)
            pl.BlockSpec((ci, 1), lambda i: (0, 0)),               # conv bias     (constant)
            pl.BlockSpec((co, ci * k), lambda i: (0, 0)),          # fc weight     (constant)
        ],
        out_specs=pl.BlockSpec((tb, co, L), lambda i: (i, 0, 0)),
        compiler_params=pltpu.CompilerParams(
            dimension_semantics=("parallel",),
            vmem_limit_bytes=32 * 1024 * 1024,
        ),
    )(deep2, x2, wt, wc2, bc2, wf2)
    return out


# ----------------------------------------------------------------------------
# Pure-JAX reference (mirrors the PyTorch code) for a correctness check.
# ----------------------------------------------------------------------------
def _reference(deep, x, conv_w, conv_b, fc_w, *, kernel_size, stride=1, padding=0):
    b, ci, n = x.shape
    _, cd, nd = deep.shape
    k, m, s, p = kernel_size, kernel_size // 2, stride, padding

    W = jnp.asarray(_interp_matrix(nd, n))                         # (N, Nd)
    xr = jnp.einsum('bcj,ij->bci', deep, W)                        # (B, Cd, N)
    y = jnp.einsum('oc,bcn->bon', conv_w.reshape(ci, cd), xr) + conv_b[None, :, None]
    mean = jnp.mean(y, axis=2, keepdims=True)
    var = jnp.sum((y - mean) ** 2, axis=2, keepdims=True) / (n - 1)
    xs = 0.5 * (y - mean) / (var + 1e-9)

    def unfold(a):
        a_pad = jnp.pad(a, ((0, 0), (0, 0), (p, p)), mode='reflect') if p > 0 else a
        L = (a_pad.shape[-1] - k) // s + 1
        win = jnp.stack([a_pad[:, :, l * s:l * s + k] for l in range(L)], axis=1)  # (B,L,C,K)
        return win

    x1 = unfold(xs)                                                # (B, L, Ci, K)
    d = jnp.abs(x1 - x1[..., m:m + 1])
    loss = 1.0 - jnp.tanh(d) ** 2
    alpha = 1.0 / jnp.sum(loss, axis=-1, keepdims=True)
    deep_loss = (loss * alpha).reshape(b, -1, ci * k)              # exact when Ci == 1
    y1 = unfold(x).reshape(b, -1, ci * k)
    out = jnp.einsum('blf,of->bol', deep_loss * y1, fc_w)
    return out


if __name__ == "__main__":
    # Small shapes consistent with the module: Ci must be 1 for the reference
    # broadcast `loss * alpha` to be well-defined.
    B, Cd, Nd = 2, 4, 8        # deep: (B, deep_channel, Nd)
    Ci, N = 1, 16              # x:    (B, feature_channel_in, N)
    Co, K, S, P = 8, 3, 1, 1   # feature_channel_out, kernel_size, stride, padding

    key = jax.random.PRNGKey(0)
    k1, k2, k3, k4, k5 = jax.random.split(key, 5)
    conv_w = jax.random.normal(k1, (Ci, Cd, 1), jnp.float32) * 0.3   # Conv1d(Cd, Ci, 1) weight
    conv_b = jax.random.normal(k2, (Ci,), jnp.float32) * 0.1         # Conv1d bias
    fc_w = jax.random.normal(k3, (Co, Ci * K), jnp.float32) * 0.2    # Linear(Ci*K, Co, bias=False)
    deep = jax.random.normal(k4, (B, Cd, Nd), jnp.float32)
    x = jax.random.normal(k5, (B, Ci, N), jnp.float32)

    out = deep_conv1d(deep, x, conv_w, conv_b, fc_w,
                      kernel_size=K, stride=S, padding=P)
    out = jax.block_until_ready(out)

    ref = _reference(deep, x, conv_w, conv_b, fc_w,
                     kernel_size=K, stride=S, padding=P)
    ref = jax.block_until_ready(ref)

    assert out.shape == ref.shape, (out.shape, ref.shape)
    # Tolerance 1e-2: pl.reciprocal(approx=True) for alpha (and MXU default
    # precision) perturbs the result slightly vs. the exact-divide reference.
    max_err = float(jnp.max(jnp.abs(out - ref)))
    assert np.isfinite(max_err), "non-finite output"
    assert max_err < 1e-2, f"mismatch vs reference, max abs err = {max_err}"

    print("KERNEL_OK")
</pallas_src>

<mosaic_0001>
module attributes {stable_mosaic.version = 11 : i64} {
  func.func @_deep_conv1d_kernel(%arg0: i32, %arg1: memref<8x8xf32, #tpu.memory_space<vmem>>, %arg2: memref<2x16xf32, #tpu.memory_space<vmem>>, %arg3: memref<8x16xf32, #tpu.memory_space<vmem>>, %arg4: memref<1x4xf32, #tpu.memory_space<vmem>>, %arg5: memref<1x1xf32, #tpu.memory_space<vmem>>, %arg6: memref<8x3xf32, #tpu.memory_space<vmem>>, %arg7: memref<2x8x16xf32, #tpu.memory_space<vmem>>) attributes {dimension_semantics = [#tpu.dimension_semantics<parallel>], iteration_bounds = array<i64: 1>, scalar_prefetch = 0 : i64, scratch_operands = 0 : i64, tpu.core_type = #tpu.core_type<tc>, window_params = [{transform_indices = @transform_0, window_bounds = array<i64: 8, 8>}, {transform_indices = @transform_1, window_bounds = array<i64: 2, 16>}, {pipeline_mode = #tpu.pipeline_mode<synchronous>, transform_indices = @transform_2, window_bounds = array<i64: 8, 16>}, {pipeline_mode = #tpu.pipeline_mode<synchronous>, transform_indices = @transform_3, window_bounds = array<i64: 1, 4>}, {pipeline_mode = #tpu.pipeline_mode<synchronous>, transform_indices = @transform_4, window_bounds = array<i64: 1, 1>}, {pipeline_mode = #tpu.pipeline_mode<synchronous>, transform_indices = @transform_5, window_bounds = array<i64: 8, 3>}, {transform_indices = @transform_6, window_bounds = array<i64: 2, 8, 16>}]} {
    %c0 = arith.constant 0 : index
    %c0_0 = arith.constant 0 : index
    %0 = vector.load %arg1[%c0, %c0_0] : memref<8x8xf32, #tpu.memory_space<vmem>>, vector<8x8xf32>
    %c0_1 = arith.constant 0 : index
    %c0_2 = arith.constant 0 : index
    %1 = vector.load %arg3[%c0_1, %c0_2] : memref<8x16xf32, #tpu.memory_space<vmem>>, vector<8x16xf32>
    %cst = arith.constant dense<0.000000e+00> : vector<8x16xf32>
    %2 = tpu.matmul %0, %1, %cst {dimension_numbers = #tpu.dot_dimension_numbers<[1], [0], [0], [1], [0, 0, 1, 1], [], []>} : vector<8x8xf32>, vector<8x16xf32>, vector<8x16xf32> -> vector<8x16xf32>
    %3 = vector.shape_cast %2 : vector<8x16xf32> to vector<2x4x16xf32>
    %c0_3 = arith.constant 0 : index
    %c0_4 = arith.constant 0 : index
    %4 = vector.load %arg4[%c0_3, %c0_4] : memref<1x4xf32, #tpu.memory_space<vmem>>, vector<1x4xf32>
    %5 = vector.shape_cast %4 : vector<1x4xf32> to vector<1x1x4xf32>
    %6 = vector.shape_cast %5 : vector<1x1x4xf32> to vector<1x1x4xf32>
    %7 = vector.broadcast %6 : vector<1x1x4xf32> to vector<2x1x4xf32>
    "tpu.trace_start"() <{level = 10 : i32, message = "boc,bcn->bon"}> : () -> ()
    %cst_5 = arith.constant dense<0.000000e+00> : vector<2x1x16xf32>
    %8 = tpu.matmul %7, %3, %cst_5 {dimension_numbers = #tpu.dot_dimension_numbers<[2], [1], [1], [2], [0, 0, 0, 1, 1, 2], [0], [0]>} : vector<2x1x4xf32>, vector<2x4x16xf32>, vector<2x1x16xf32> -> vector<2x1x16xf32>
    "tpu.trace_stop"() : () -> ()
    %c0_6 = arith.constant 0 : index
    %c0_7 = arith.constant 0 : index
    %9 = vector.load %arg5[%c0_6, %c0_7] : memref<1x1xf32, #tpu.memory_space<vmem>>, vector<1x1xf32>
    %10 = vector.shape_cast %9 : vector<1x1xf32> to vector<1x1x1xf32>
    %11 = vector.broadcast %10 : vector<1x1x1xf32> to vector<2x1x16xf32>
    %12 = arith.addf %8, %11 : vector<2x1x16xf32>
    %13 = vector.shape_cast %12 : vector<2x1x16xf32> to vector<2x16xf32>
    %cst_8 = arith.constant dense<0.000000e+00> : vector<2xf32>
    %14 = vector.multi_reduction <add>, %13, %cst_8 [1] : vector<2x16xf32> to vector<2xf32>
    %15 = vector.shape_cast %14 : vector<2xf32> to vector<2x1xf32>
    %cst_9 = arith.constant 1.600000e+01 : f32
    %16 = vector.broadcast %cst_9 : f32 to vector<2x1xf32>
    %17 = arith.divf %15, %16 : vector<2x1xf32>
    %18 = vector.broadcast %17 : vector<2x1xf32> to vector<2x16xf32>
    %19 = arith.subf %13, %18 : vector<2x16xf32>
    %20 = arith.mulf %19, %19 : vector<2x16xf32>
    %cst_10 = arith.constant dense<0.000000e+00> : vector<2xf32>
    %21 = vector.multi_reduction <add>, %20, %cst_10 [1] : vector<2x16xf32> to vector<2xf32>
    %22 = vector.shape_cast %21 : vector<2xf32> to vector<2x1xf32>
    %cst_11 = arith.constant 0.0666666701 : f32
    %23 = vector.broadcast %cst_11 : f32 to vector<2x1xf32>
    %24 = arith.mulf %22, %23 : vector<2x1xf32>
    %cst_12 = arith.constant 9.99999971E-10 : f32
    %25 = vector.broadcast %cst_12 : f32 to vector<2x1xf32>
    %26 = arith.addf %24, %25 : vector<2x1xf32>
    %cst_13 = arith.constant 5.000000e-01 : f32
    %27 = vector.broadcast %cst_13 : f32 to vector<2x1xf32>
    %28 = arith.divf %27, %26 : vector<2x1xf32>
    %29 = vector.broadcast %28 : vector<2x1xf32> to vector<2x16xf32>
    %30 = arith.mulf %19, %29 : vector<2x16xf32>
    %31 = vector.extract_strided_slice %30 {offsets = [0, 1], sizes = [2, 1], strides = [1, 1]} : vector<2x16xf32> to vector<2x1xf32>
    %32 = vector.extract_strided_slice %30 {offsets = [0, 14], sizes = [2, 1], strides = [1, 1]} : vector<2x16xf32> to vector<2x1xf32>
    %33 = tpu.concatenate %31, %30, %32 in 1 : vector<2x1xf32>, vector<2x16xf32>, vector<2x1xf32> -> vector<2x18xf32>
    %34 = vector.extract_strided_slice %33 {offsets = [0, 0], sizes = [2, 16], strides = [1, 1]} : vector<2x18xf32> to vector<2x16xf32>
    %35 = vector.extract_strided_slice %33 {offsets = [0, 1], sizes = [2, 16], strides = [1, 1]} : vector<2x18xf32> to vector<2x16xf32>
    %36 = vector.extract_strided_slice %33 {offsets = [0, 2], sizes = [2, 16], strides = [1, 1]} : vector<2x18xf32> to vector<2x16xf32>
    %c0_14 = arith.constant 0 : index
    %c0_15 = arith.constant 0 : index
    %37 = vector.load %arg2[%c0_14, %c0_15] : memref<2x16xf32, #tpu.memory_space<vmem>>, vector<2x16xf32>
    %38 = vector.extract_strided_slice %37 {offsets = [0, 1], sizes = [2, 1], strides = [1, 1]} : vector<2x16xf32> to vector<2x1xf32>
    %39 = vector.extract_strided_slice %37 {offsets = [0, 14], sizes = [2, 1], strides = [1, 1]} : vector<2x16xf32> to vector<2x1xf32>
    %40 = tpu.concatenate %38, %37, %39 in 1 : vector<2x1xf32>, vector<2x16xf32>, vector<2x1xf32> -> vector<2x18xf32>
    %41 = vector.extract_strided_slice %40 {offsets = [0, 0], sizes = [2, 16], strides = [1, 1]} : vector<2x18xf32> to vector<2x16xf32>
    %42 = vector.extract_strided_slice %40 {offsets = [0, 1], sizes = [2, 16], strides = [1, 1]} : vector<2x18xf32> to vector<2x16xf32>
    %43 = vector.extract_strided_slice %40 {offsets = [0, 2], sizes = [2, 16], strides = [1, 1]} : vector<2x18xf32> to vector<2x16xf32>
    %44 = arith.subf %34, %35 : vector<2x16xf32>
    %45 = math.absf %44 : vector<2x16xf32>
    %46 = math.tanh %45 : vector<2x16xf32>
    %47 = arith.mulf %46, %46 : vector<2x16xf32>
    %cst_16 = arith.constant 1.000000e+00 : f32
    %48 = vector.broadcast %cst_16 : f32 to vector<2x16xf32>
    %49 = arith.subf %48, %47 : vector<2x16xf32>
    %50 = arith.subf %35, %35 : vector<2x16xf32>
    %51 = math.absf %50 : vector<2x16xf32>
    %52 = math.tanh %51 : vector<2x16xf32>
    %53 = arith.mulf %52, %52 : vector<2x16xf32>
    %cst_17 = arith.constant 1.000000e+00 : f32
    %54 = vector.broadcast %cst_17 : f32 to vector<2x16xf32>
    %55 = arith.subf %54, %53 : vector<2x16xf32>
    %56 = arith.subf %36, %35 : vector<2x16xf32>
    %57 = math.absf %56 : vector<2x16xf32>
    %58 = math.tanh %57 : vector<2x16xf32>
    %59 = arith.mulf %58, %58 : vector<2x16xf32>
    %cst_18 = arith.constant 1.000000e+00 : f32
    %60 = vector.broadcast %cst_18 : f32 to vector<2x16xf32>
    %61 = arith.subf %60, %59 : vector<2x16xf32>
    %cst_19 = arith.constant 0.000000e+00 : f32
    %62 = vector.broadcast %cst_19 : f32 to vector<2x16xf32>
    %63 = arith.addf %62, %49 : vector<2x16xf32>
    %64 = arith.addf %63, %55 : vector<2x16xf32>
    %65 = arith.addf %64, %61 : vector<2x16xf32>
    %66 = tpu.reciprocal %65 {approx = true} : vector<2x16xf32> -> vector<2x16xf32>
    %67 = arith.mulf %49, %66 : vector<2x16xf32>
    %68 = arith.mulf %67, %41 : vector<2x16xf32>
    %69 = arith.mulf %55, %66 : vector<2x16xf32>
    %70 = arith.mulf %69, %42 : vector<2x16xf32>
    %71 = arith.mulf %61, %66 : vector<2x16xf32>
    %72 = arith.mulf %71, %43 : vector<2x16xf32>
    %73 = vector.shape_cast %68 : vector<2x16xf32> to vector<2x1x16xf32>
    %74 = vector.shape_cast %70 : vector<2x16xf32> to vector<2x1x16xf32>
    %75 = vector.shape_cast %72 : vector<2x16xf32> to vector<2x1x16xf32>
    %76 = tpu.concatenate %73, %74, %75 in 1 : vector<2x1x16xf32>, vector<2x1x16xf32>, vector<2x1x16xf32> -> vector<2x3x16xf32>
    %c0_20 = arith.constant 0 : index
    %c0_21 = arith.constant 0 : index
    %77 = vector.load %arg6[%c0_20, %c0_21] : memref<8x3xf32, #tpu.memory_space<vmem>>, vector<8x3xf32>
    %78 = vector.shape_cast %77 : vector<8x3xf32> to vector<1x8x3xf32>
    %79 = vector.shape_cast %78 : vector<1x8x3xf32> to vector<1x8x3xf32>
    %80 = vector.broadcast %79 : vector<1x8x3xf32> to vector<2x8x3xf32>
    "tpu.trace_start"() <{level = 10 : i32, message = "bof,bfl->bol"}> : () -> ()
    %cst_22 = arith.constant dense<0.000000e+00> : vector<2x8x16xf32>
    %81 = tpu.matmul %80, %76, %cst_22 {dimension_numbers = #tpu.dot_dimension_numbers<[2], [1], [1], [2], [0, 0, 0, 1, 1, 2], [0], [0]>} : vector<2x8x3xf32>, vector<2x3x16xf32>, vector<2x8x16xf32> -> vector<2x8x16xf32>
    "tpu.trace_stop"() : () -> ()
    %c0_23 = arith.constant 0 : index
    %c0_24 = arith.constant 0 : index
    %c0_25 = arith.constant 0 : index
    %82 = vector.load %arg7[%c0_23, %c0_24, %c0_25] : memref<2x8x16xf32, #tpu.memory_space<vmem>>, vector<2x8x16xf32>
    tpu.vector_store %arg7[%c0_23, %c0_24, %c0_25], %81 {strides = array<i32>} : memref<2x8x16xf32, #tpu.memory_space<vmem>>, vector<2x8x16xf32>,
    return
  }
  func.func @transform_0(%arg0: i32) -> (i32, i32) {
    %c0_i32 = arith.constant 0 : i32
    %c0_i32_0 = arith.constant 0 : i32
    return %arg0, %c0_i32 : i32, i32
  }
  func.func @transform_1(%arg0: i32) -> (i32, i32) {
    %c0_i32 = arith.constant 0 : i32
    %c0_i32_0 = arith.constant 0 : i32
    return %arg0, %c0_i32 : i32, i32
  }
  func.func @transform_2(%arg0: i32) -> (i32, i32) {
    %c0_i32 = arith.constant 0 : i32
    %c0_i32_0 = arith.constant 0 : i32
    %c0_i32_1 = arith.constant 0 : i32
    return %c0_i32, %c0_i32_0 : i32, i32
  }
  func.func @transform_3(%arg0: i32) -> (i32, i32) {
    %c0_i32 = arith.constant 0 : i32
    %c0_i32_0 = arith.constant 0 : i32
    %c0_i32_1 = arith.constant 0 : i32
    return %c0_i32, %c0_i32_0 : i32, i32
  }
  func.func @transform_4(%arg0: i32) -> (i32, i32) {
    %c0_i32 = arith.constant 0 : i32
    %c0_i32_0 = arith.constant 0 : i32
    %c0_i32_1 = arith.constant 0 : i32
    return %c0_i32, %c0_i32_0 : i32, i32
  }
  func.func @transform_5(%arg0: i32) -> (i32, i32) {
    %c0_i32 = arith.constant 0 : i32
    %c0_i32_0 = arith.constant 0 : i32
    %c0_i32_1 = arith.constant 0 : i32
    return %c0_i32, %c0_i32_0 : i32, i32
  }
  func.func @transform_6(%arg0: i32) -> (i32, i32, i32) {
    %c0_i32 = arith.constant 0 : i32
    %c0_i32_0 = arith.constant 0 : i32
    %c0_i32_1 = arith.constant 0 : i32
    return %arg0, %c0_i32, %c0_i32_0 : i32, i32, i32
  }
}

</mosaic_0001>

<llo_original>
// kernel: tpu_custom_call.1
$region0: #{tpu_custom_call.1}
  #allocation0 [shape = 'u32[]', space=smem, size = 0x4, offset = 0x4, fixed_abs, tag = 'smem constant byte address 0x4 - core index']
  #allocation1 [shape = 'u32[72,128]{1,0:T(1,128)}', space=vmem, size = 0x9000, scoped, tag = 'internal scratch']
  #allocation2 [shape = 'f32[1,1]{1,0:T(1,128)S(1)}', space=vmem, size = 0x200, scoped, tag = 'scoped memory for tpu_custom_call.1']
  %s0 = inlined_call_operand.vmem [shape: f32[8,8], index: 0, kind: input, shape index: {}]
  %s1 = inlined_call_operand.vmem [shape: f32[2,16], index: 1, kind: input, shape index: {}]
  %s2 = inlined_call_operand.hbm [shape: f32[8,16], index: 2, kind: input, shape index: {}]
  %s3 = inlined_call_operand.vmem [shape: f32[1,4], index: 3, kind: input, shape index: {}]
  %s4 = inlined_call_operand.<no memory space> [shape: f32[1,1], index: 4, kind: input, shape index: {}]
  %s5 = inlined_call_operand.vmem [shape: f32[8,3], index: 5, kind: input, shape index: {}]
  %s6 = inlined_call_operand.hbm [shape: f32[2,8,16], index: 6, kind: output, shape index: {}]
  %s7 = sld [smem:[#allocation0]]
  $region38: #{tpu_custom_call.1} parent=0
    _
  %s9 = ssub.s32 1, %s7
  %s10 = scalar_select 0, %s9, %s7
  %v11 = vstv %s4
  %12 = vst [vmem:[#allocation2] sm:$0x1] %v11
  $region1: #{tpu_custom_call.1} parent=0
    #allocation3 [shape = 'u8[4096]{0}', space=vmem, size = 0x1000, scoped, tag = 'input window, operand 2, single buffered']
    #allocation4 [shape = 's32[1]{0}', space=sflag, size = 0x4, scoped, tag = 'scoped memory for tpu_custom_call.1']
    #allocation5 [shape = 's32[1]{0}', space=sflag, size = 0x4, scoped, tag = 'scoped memory for tpu_custom_call.1']
    #allocation6 [shape = 'u8[8192]{0}', space=vmem, size = 0x2000, scoped, tag = 'output window, operand 0, single buffered']
    %13 = vsyncpa [#allocation4], 0
    %14 = vsyncpa [#allocation5], 0
    // Predicated region
    $region2: #{tpu_custom_call.1} parent=1 // pred_check
      _
    $region3: #{tpu_custom_call.1} parent=1 // pred_check_branch
      %16 = sbr.rel (0) target = $region5
    $region4: #{tpu_custom_call.1} parent=1 // pred_region
      _
    $region5: #{tpu_custom_call.1} parent=1 // pred_fallthru
      _
    // Predicated region
    $region6: #{tpu_custom_call.1} parent=1 // pred_check
      _
    $region7: #{tpu_custom_call.1} parent=1 // pred_check_branch
      %18 = sbr.rel (0) target = $region9
    $region8: #{tpu_custom_call.1} parent=1 // pred_region
      _
    $region9: #{tpu_custom_call.1} parent=1 // pred_fallthru
      _
    // Predicated region
    $region10: #{tpu_custom_call.1} parent=1 // pred_check
      _
    $region11: #{tpu_custom_call.1} parent=1 // pred_check_branch
      %20 = sbr.rel (0) target = $region13
    $region12: #{tpu_custom_call.1} parent=1 // pred_region
      %22 = vsyncadd [#allocation4], 0
      %s24 = sshll.u32 %s2, 4
      %s25 = int_to_ptr.hbm [resolvable:$true] %s24
      %s26 = sshll.u32 [#allocation3], 4
      %s27 = int_to_ptr.vmem [resolvable:$true] %s26
      %29 = dma.hbm_to_vmem [thread:$0]  %s25, 128, %s27, [#allocation4]
    $region13: #{tpu_custom_call.1} parent=1 // pred_fallthru
      _
    // Predicated region
    $region14: #{tpu_custom_call.1} parent=1 // pred_check
      _
    $region15: #{tpu_custom_call.1} parent=1 // pred_check_branch
      %31 = sbr.rel (0) target = $region17
    $region16: #{tpu_custom_call.1} parent=1 // pred_region
      _
    $region17: #{tpu_custom_call.1} parent=1 // pred_fallthru
      _
    // Predicated region
    $region18: #{tpu_custom_call.1} parent=1 // pred_check
      _
    $region19: #{tpu_custom_call.1} parent=1 // pred_check_branch
      %33 = sbr.rel (0) target = $region21
    $region20: #{tpu_custom_call.1} parent=1 // pred_region
      _
    $region21: #{tpu_custom_call.1} parent=1 // pred_fallthru
      _
    // Predicated region
    $region22: #{tpu_custom_call.1} parent=1 // pred_check
      _
    $region23: #{tpu_custom_call.1} parent=1 // pred_check_branch
      %35 = sbr.rel (0) target = $region25
    $region24: #{tpu_custom_call.1} parent=1 // pred_region
      _
    $region25: #{tpu_custom_call.1} parent=1 // pred_fallthru
      _
    // Predicated region
    $region26: #{tpu_custom_call.1} parent=1 // pred_check
      _
    $region27: #{tpu_custom_call.1} parent=1 // pred_check_branch
      %37 = sbr.rel (0) target = $region29
    $region28: #{tpu_custom_call.1} parent=1 // pred_region
      %39 = dma.done [#allocation4], 128
    $region29: #{tpu_custom_call.1} parent=1 // pred_fallthru
      _
    %v40 = vld [vmem:[%s0] sm:$0xff]
    %v41 = vld [vmem:[#allocation3] sm:$0xff]
    %vm42 = vcmask 64512
    %v44 = vsel %vm42, %v40, 0
    %46 = vmatpush.msra.mxu0 0.0
    %47 = vmatpush.msra.mxu0 0.0
    %48 = vmatpush.msra.mxu0 0.0
    %49 = vmatpush.msra.mxu0 0.0
    %50 = vmatpush.msra.mxu0 0.0
    %51 = vmatpush.msra.mxu0 0.0
    %52 = vmatpush.msra.mxu0 0.0
    %53 = vmatpush.msra.mxu0 0.0
    %54 = vmatpush.msra.mxu0 0.0
    %55 = vmatpush.msra.mxu0 0.0
    %56 = vmatpush.msra.mxu0 0.0
    %57 = vmatpush.msra.mxu0 0.0
    %58 = vmatpush.msra.mxu0 0.0
    %59 = vmatpush.msra.mxu0 0.0
    %60 = vmatpush.msra.mxu0 0.0
    %61 = vmatpush.msra.mxu0 %v41
    %62 = vmatmul.f32.gmra.mxu0 %v44
    %v63 = vpop.f32.mrf.mxu0
    %v64 = vadd.f32 0.0, %v63
    %65 = vdwg.mxu0
    %v67 = vrot.slane %v64, 4
    %v68 = vld [vmem:[%s3] sm:$0x1]
    %v69 = vld [vmem:[#allocation2] sm:$0x1]
    %71 = vset.pattern.permute.xlu0 0
    %72 = vperm.xlu0 %71, %v69
    %v73 = vpop.permute.xlu0 %72
    %v75 = vperm.slane %v73, 0
    %vm76 = vcmask 31744
    %v78 = vsel %vm76, %v68, 0
    %vm80 = vcmask 1043456
    %v81 = vsel %vm80, %v64, 0
    %83 = vmatpush.msra.mxu0 0.0
    %84 = vmatpush.msra.mxu0 0.0
    %85 = vmatpush.msra.mxu0 0.0
    %86 = vmatpush.msra.mxu0 0.0
    %87 = vmatpush.msra.mxu0 0.0
    %88 = vmatpush.msra.mxu0 0.0
    %89 = vmatpush.msra.mxu0 0.0
    %90 = vmatpush.msra.mxu0 0.0
    %91 = vmatpush.msra.mxu0 0.0
    %92 = vmatpush.msra.mxu0 0.0
    %93 = vmatpush.msra.mxu0 0.0
    %94 = vmatpush.msra.mxu0 0.0
    %95 = vmatpush.msra.mxu0 0.0
    %96 = vmatpush.msra.mxu0 0.0
    %97 = vmatpush.msra.mxu0 0.0
    %98 = vmatpush.msra.mxu0 %v81
    %99 = vmatmul.f32.gmra.mxu0 %v78
    %v100 = vpop.f32.mrf.mxu0
    %v101 = vadd.f32 %v75, %v100
    %102 = vdwg.mxu0
    %v103 = vsel %vm80, %v67, 0
    %105 = vmatpush.msra.mxu0 0.0
    %106 = vmatpush.msra.mxu0 0.0
    %107 = vmatpush.msra.mxu0 0.0
    %108 = vmatpush.msra.mxu0 0.0
    %109 = vmatpush.msra.mxu0 0.0
    %110 = vmatpush.msra.mxu0 0.0
    %111 = vmatpush.msra.mxu0 0.0
    %112 = vmatpush.msra.mxu0 0.0
    %113 = vmatpush.msra.mxu0 0.0
    %114 = vmatpush.msra.mxu0 0.0
    %115 = vmatpush.msra.mxu0 0.0
    %116 = vmatpush.msra.mxu0 0.0
    %117 = vmatpush.msra.mxu0 0.0
    %118 = vmatpush.msra.mxu0 0.0
    %119 = vmatpush.msra.mxu0 0.0
    %120 = vmatpush.msra.mxu0 %v103
    %121 = vmatmul.f32.gmra.mxu0 %v78
    %v122 = vpop.f32.mrf.mxu0
    %v123 = vadd.f32 %v75, %v122
    %124 = vdwg.mxu0
    %v127 = vrot.slane %v123, 7
    %vm128 = vcmask 1041409
    %v129 = vsel %vm128, %v127, %v101
    %vm131 = vcmask 123904
    %v132 = vsel %vm131, %v129, 0.0
    %133 = vadd.xlane.f32.xlu0 %v132
    %v134 = vpop.xlane.xlu0 %133
    %v135 = vrcp.pop 16.0
    %v136 = vmul.f32 16.0, %v135
    %v137 = vsub.f32 1.0, %v136
    %v138 = vmul.f32 %v135, %v137
    %v139 = vadd.f32 %v135, %v138
    %vm140 = vweird.f32 %v135
    %v141 = vsel %vm140, %v135, %v139
    %v142 = vmul.f32 %v134, %v141
    %v144 = vrot.slane %v142, 1
    %v147 = vsub.f32 %v101, %v142
    %v148 = vsub.f32 %v123, %v144
    %v149 = vmul.f32 %v147, %v147
    %v150 = vmul.f32 %v148, %v148
    %v153 = vrot.slane %v150, 7
    %v154 = vsel %vm128, %v153, %v149
    %v156 = vsel %vm131, %v154, 0.0
    %157 = vadd.xlane.f32.xlu0 %v156
    %v158 = vpop.xlane.xlu0 %157
    %v159 = vmul.f32 %v158, 0.06666667
    %v160 = vadd.f32 %v159, 1e-09
    %v161 = vrcp.pop %v160
    %v162 = vmul.f32 %v160, %v161
    %v163 = vsub.f32 1.0, %v162
    %v164 = vmul.f32 %v161, %v163
    %v165 = vadd.f32 %v161, %v164
    %vm166 = vweird.f32 %v160
    %vm167 = vweird.f32 %v161
    %vm168 = vmor %vm166, %vm167
    %v169 = vsel %vm168, %v161, %v165
    %v170 = vand.u32 2147483647, %v160
    %vm171 = vcmp.eq.f32.partialorder %v170, 8.507059e+37
    %v172 = vand.u32 %v160, 2147483648
    %v173 = vor.u32 1.1754944e-38, %v172
    %v174 = vsel %vm171, %v173, %v169
    %v175 = vmul.f32 0.5, %v174
    %v177 = vrot.slane %v175, 1
    %v180 = vmul.f32 %v147, %v175
    %v181 = vmul.f32 %v148, %v177
    %v184 = vrot.slane %v181, 7
    %v185 = vsel %vm128, %v184, %v180
    %186 = vrot.lane.b32.xlu0 %v185, 127
    %v187 = vpop.permute.xlu0 %186
    %189 = vrot.lane.b32.xlu0 %v185, 1
    %v190 = vpop.permute.xlu0 %189
    %192 = vrot.lane.b32.xlu0 %v185, 3
    %v193 = vpop.permute.xlu0 %192
    %vm195 = vcmask 7168
    %v196 = vsel %vm195, %v187, %v190
    %vm197 = vcmask 138240
    %v198 = vsel %vm197, %v196, %v193
    %v199 = vld [vmem:[%s1] sm:$0x3]
    %201 = vrot.lane.b32.xlu0 %v199, 127
    %v202 = vpop.permute.xlu0 %201
    %204 = vrot.lane.b32.xlu0 %v199, 1
    %v205 = vpop.permute.xlu0 %204
    %207 = vrot.lane.b32.xlu0 %v199, 3
    %v208 = vpop.permute.xlu0 %207
    %v210 = vsel %vm195, %v202, %v205
    %v211 = vsel %vm197, %v210, %v208
    %213 = vrot.lane.b32.xlu0 %v198, 127
    %v214 = vpop.permute.xlu0 %213
    %v216 = vsub.f32 %v198, %v214
    %v217 = vand.u32 2147483647, %v216
    %v218 = vtanh.pop %v217
    %v219 = vmul.f32 %v218, %v218
    %v220 = vsub.f32 1.0, %v219
    %v221 = vsub.f32 %v198, %v198
    %v222 = vand.u32 2147483647, %v221
    %v223 = vtanh.pop %v222
    %v224 = vmul.f32 %v223, %v223
    %v225 = vsub.f32 1.0, %v224
    %226 = vrot.lane.b32.xlu0 %v198, 1
    %v227 = vpop.permute.xlu0 %226
    %v229 = vsub.f32 %v198, %v227
    %v230 = vand.u32 2147483647, %v229
    %v231 = vtanh.pop %v230
    %v232 = vmul.f32 %v231, %v231
    %v233 = vsub.f32 1.0, %v232
    %v234 = vadd.f32 %v220, 0.0
    %236 = vrot.lane.b32.xlu0 %v225, 127
    %v237 = vpop.permute.xlu0 %236
    %v239 = vadd.f32 %v234, %v237
    %241 = vrot.lane.b32.xlu0 %v233, 126
    %v242 = vpop.permute.xlu0 %241
    %v244 = vadd.f32 %v239, %v242
    %v245 = vrcp.pop %v244
    %v246 = vmul.f32 %v220, %v245
    %v247 = vmul.f32 %v246, %v211
    %249 = vrot.lane.b32.xlu0 %v245, 1
    %v250 = vpop.permute.xlu0 %249
    %v252 = vmul.f32 %v225, %v250
    %v253 = vmul.f32 %v252, %v211
    %254 = vrot.lane.b32.xlu0 %v245, 2
    %v255 = vpop.permute.xlu0 %254
    %v257 = vmul.f32 %v233, %v255
    %v258 = vmul.f32 %v257, %v211
    %v260 = vrot.slane %v247, 1
    %v263 = vrot.slane %v253, 1
    %v265 = vrot.slane %v258, 1
    %v266 = vperm.slane %v253, 0
    %v267 = vperm.slane %v263, 0
    %268 = vrot.lane.b32.xlu0 %v266, 127
    %v269 = vpop.permute.xlu0 %268
    %270 = vrot.lane.b32.xlu0 %v267, 127
    %v271 = vpop.permute.xlu0 %270
    %v274 = vperm.slane %v258, 0
    %v275 = vperm.slane %v265, 0
    %276 = vrot.lane.b32.xlu0 %v274, 126
    %v277 = vpop.permute.xlu0 %276
    %278 = vrot.lane.b32.xlu0 %v275, 126
    %v279 = vpop.permute.xlu0 %278
    %vm282 = vcmask 1040384
    %v283 = vsel %vm282, %v247, %v269
    %v284 = vsel %vm282, %v260, %v271
    %vm285 = vcmask 1041408
    %v286 = vsel %vm285, %v283, %v277
    %v287 = vsel %vm285, %v284, %v279
    %v288 = vld [vmem:[%s5] sm:$0xff]
    %vm289 = vcmask 23552
    %v291 = vsel %vm289, %v288, 0
    %vm293 = vcmask 1042432
    %v295 = vsel %vm293, %v286, 0
    %297 = vmatpush.msra.mxu0 0.0
    %298 = vmatpush.msra.mxu0 0.0
    %299 = vmatpush.msra.mxu0 0.0
    %300 = vmatpush.msra.mxu0 0.0
    %301 = vmatpush.msra.mxu0 0.0
    %302 = vmatpush.msra.mxu0 0.0
    %303 = vmatpush.msra.mxu0 0.0
    %304 = vmatpush.msra.mxu0 0.0
    %305 = vmatpush.msra.mxu0 0.0
    %306 = vmatpush.msra.mxu0 0.0
    %307 = vmatpush.msra.mxu0 0.0
    %308 = vmatpush.msra.mxu0 0.0
    %309 = vmatpush.msra.mxu0 0.0
    %310 = vmatpush.msra.mxu0 0.0
    %311 = vmatpush.msra.mxu0 0.0
    %312 = vmatpush.msra.mxu0 %v295
    %313 = vmatmul.f32.gmra.mxu0 %v291
    %v314 = vpop.f32.mrf.mxu0
    %v315 = vadd.f32 0.0, %v314
    %316 = vdwg.mxu0
    %v318 = vsel %vm293, %v287, 0
    %320 = vmatpush.msra.mxu0 0.0
    %321 = vmatpush.msra.mxu0 0.0
    %322 = vmatpush.msra.mxu0 0.0
    %323 = vmatpush.msra.mxu0 0.0
    %324 = vmatpush.msra.mxu0 0.0
    %325 = vmatpush.msra.mxu0 0.0
    %326 = vmatpush.msra.mxu0 0.0
    %327 = vmatpush.msra.mxu0 0.0
    %328 = vmatpush.msra.mxu0 0.0
    %329 = vmatpush.msra.mxu0 0.0
    %330 = vmatpush.msra.mxu0 0.0
    %331 = vmatpush.msra.mxu0 0.0
    %332 = vmatpush.msra.mxu0 0.0
    %333 = vmatpush.msra.mxu0 0.0
    %334 = vmatpush.msra.mxu0 0.0
    %335 = vmatpush.msra.mxu0 %v318
    %336 = vmatmul.f32.gmra.mxu0 %v291
    %v337 = vpop.f32.mrf.mxu0
    %v338 = vadd.f32 0.0, %v337
    %339 = vdwg.mxu0
    %vm340 = vcmask 130048
    %341 = vst.msk [vmem:[#allocation6] sm:$0xff] %vm340, %v315
    %342 = vst.msk [vmem:[#allocation6 + $0x8] sm:$0xff] %vm340, %v338
    // Predicated region
    $region30: #{tpu_custom_call.1} parent=1 // pred_check
      _
    $region31: #{tpu_custom_call.1} parent=1 // pred_check_branch
      %344 = sbr.rel (0) target = $region33
    $region32: #{tpu_custom_call.1} parent=1 // pred_region
      %346 = vsyncadd [#allocation5], 0
      %s347 = sshll.u32 [#allocation6], 4
      %s348 = int_to_ptr.vmem [resolvable:$true] %s347
      %s349 = sshll.u32 %s6, 4
      %s350 = int_to_ptr.hbm [resolvable:$true] %s349
      %355 = dma.vmem_to_hbm [thread:$0]  %s348, 256, %s350, [#allocation5], 128, 128, 8
    $region33: #{tpu_custom_call.1} parent=1 // pred_fallthru
      _
    // Predicated region
    $region34: #{tpu_custom_call.1} parent=1 // pred_check
      _
    $region35: #{tpu_custom_call.1} parent=1 // pred_check_branch
      %357 = sbr.rel (0) target = $region37
    $region36: #{tpu_custom_call.1} parent=1 // pred_region
      %359 = dma.done [#allocation5], 256
    $region37: #{tpu_custom_call.1} parent=1 // pred_fallthru
      _
    %360 = vsyncpa [#allocation4], 1
    %361 = vsyncpa [#allocation5], 1

</llo_original>
